<compile_context>
chip_gen: v6e
topology: v6e:2x2x1
jax: 0.10.0
libtpu: 0.0.40
codegen_flags: <defaults>
</compile_context>

<pallas_src>
import jax
import jax.numpy as jnp
from jax.experimental import pallas as pl
from jax.experimental.pallas import tpu as pltpu


# ---------------------------------------------------------------------------
# Pallas kernel: fused scale+translate MLPs + coupling update + log-det.
# ---------------------------------------------------------------------------
def _coupling_kernel(x_ref, w_ref, aux_ref, u_ref, ld_ref):
    D = x_ref.shape[1]
    H2 = w_ref.shape[1]          # 2 * n_hidden
    H = H2 // 2

    x = x_ref[...]               # (TB, D) f32

    aux = aux_ref[...]           # (8, 2H): rows = b1 | b2 | b3ext | mask | 1-mask | 0..
    b1 = aux[0:1, :]
    b2 = aux[1:2, :]
    b3 = aux[2:3, :]
    mask = aux[3:4, :D]          # (1, D)
    omm = aux[4:5, :D]           # (1, D) == 1 - mask

    w1 = w_ref[0][:D, :]         # (D, 2H)  = [sw1 | tw1], mask folded into rows
    w2 = w_ref[1]                # (2H, 2H) = blockdiag(sw2, tw2)
    w3 = w_ref[2]                # (2H, 2H) cols: [sw3 | tw3 | logdet-col | zeros]

    # ---- fused layer 1 (scale half -> tanh, translate half -> relu) ----
    z = jnp.dot(x, w1, preferred_element_type=jnp.float32) + b1        # (TB, 2H)
    lane = jax.lax.broadcasted_iota(jnp.int32, z.shape, 1)
    is_scale = lane < H
    a = jnp.where(is_scale, jnp.tanh(z), jnp.maximum(z, 0.0))

    # ---- fused layer 2 ----
    z = jnp.dot(a, w2, preferred_element_type=jnp.float32) + b2
    a = jnp.where(is_scale, jnp.tanh(z), jnp.maximum(z, 0.0))

    # ---- fused layer 3: columns [0:D)=s, [D:2D)=t, [2D]=log|det J| ----
    z3 = jnp.dot(a, w3, preferred_element_type=jnp.float32) + b3       # (TB, 2H)
    s = z3[:, :D]
    t = z3[:, D:2 * D]
    logdet = z3[:, 2 * D:2 * D + 1]                                    # (TB, 1)

    # u = x*mask + (1 - mask) * (x - t) * exp(-s)
    x_m = x * mask
    u = x_m + omm * (x - t) * jnp.exp(-s)

    u_ref[...] = u.astype(u_ref.dtype)
    ld_ref[...] = logdet.astype(ld_ref.dtype)


# ---------------------------------------------------------------------------
# Wrapper: packs the 12 Linear params (+ mask) into 2 slabs, tiles the batch.
# ---------------------------------------------------------------------------
@jax.jit
def coupling_forward(x, mask, scale_params, translate_params):
    """x: (B, D) f32; mask: (1, D) f32; params: 3x (W(in,out), b(1,out)) per net."""
    B, D = x.shape
    (sw1, sb1), (sw2, sb2), (sw3, sb3) = scale_params
    (tw1, tb1), (tw2, tb2), (tw3, tb3) = translate_params
    H = sw1.shape[1]
    H2 = 2 * H
    assert 2 * D + 1 <= H2, "fused layer-3 needs 2*data_dim+1 <= 2*n_hidden"

    f32 = jnp.float32
    mask_flat = mask.reshape(-1).astype(f32)          # (D,)
    omm = 1.0 - mask_flat                             # (D,)

    # Layer 1: concat and fold mask into rows:  x @ (mask[:,None]*[sw1|tw1]) == (x*mask)@[sw1|tw1]
    w1f = jnp.concatenate([sw1, tw1], axis=1) * mask_flat[:, None]          # (D, 2H)
    # Layer 2: block-diagonal.
    w2f = jnp.zeros((H2, H2), f32).at[:H, :H].set(sw2).at[H:, H:].set(tw2)
    # Layer 3: block-diagonal + extra log-det column (-sw3 @ (1-mask)) on the scale rows.
    w3f = jnp.zeros((H2, H2), f32)
    w3f = w3f.at[:H, :D].set(sw3).at[H:, D:2 * D].set(tw3)
    w3f = w3f.at[:H, 2 * D].set(-(sw3 @ omm))                               # (H,)

    wslab = jnp.zeros((3, H2, H2), f32)
    wslab = wslab.at[0, :D, :].set(w1f).at[1].set(w2f).at[2].set(w3f)

    b3_ext = jnp.zeros((H2,), f32)
    b3_ext = b3_ext.at[:D].set(sb3[0]).at[D:2 * D].set(tb3[0])
    b3_ext = b3_ext.at[2 * D].set(-jnp.sum(sb3[0] * omm))

    aux = jnp.zeros((8, H2), f32)
    aux = aux.at[0, :].set(jnp.concatenate([sb1, tb1], axis=1)[0])
    aux = aux.at[1, :].set(jnp.concatenate([sb2, tb2], axis=1)[0])
    aux = aux.at[2, :].set(b3_ext)
    aux = aux.at[3, :D].set(mask_flat)
    aux = aux.at[4, :D].set(omm)

    # ---- batch tiling: TB multiple of 8, capped at 512 rows per step ----
    TB_MAX = 512
    B_pad = ((B + 7) // 8) * 8
    if B_pad <= TB_MAX:
        TB = B_pad
    else:
        TB = TB_MAX
        B_pad = ((B + TB - 1) // TB) * TB
    x_p = x if B_pad == B else jnp.pad(x, ((0, B_pad - B), (0, 0)))
    grid = (B_pad // TB,)

    u_p, ld_p = pl.pallas_call(
        _coupling_kernel,
        out_shape=(
            jax.ShapeDtypeStruct((B_pad, D), x.dtype),
            jax.ShapeDtypeStruct((B_pad, 1), jnp.float32),
        ),
        grid=grid,
        in_specs=[
            pl.BlockSpec((TB, D), lambda i: (i, 0)),          # x: tiled over batch
            pl.BlockSpec((3, H2, H2), lambda i: (0, 0, 0)),   # weights: VMEM-resident
            pl.BlockSpec((8, H2), lambda i: (0, 0)),          # biases/mask: VMEM-resident
        ],
        out_specs=(
            pl.BlockSpec((TB, D), lambda i: (i, 0)),
            pl.BlockSpec((TB, 1), lambda i: (i, 0)),
        ),
        compiler_params=pltpu.CompilerParams(dimension_semantics=("parallel",)),
    )(x_p, wslab, aux)

    return u_p[:B], ld_p[:B, 0]   # match PyTorch: log_det_J has shape (B,)


# ---------------------------------------------------------------------------
# Deterministic parameter init (PyTorch nn.Linear-style uniform +-1/sqrt(fan_in))
# ---------------------------------------------------------------------------
def _init_linear(key, fan_in, fan_out):
    kw, kb = jax.random.split(key)
    bound = 1.0 / jnp.sqrt(jnp.float32(fan_in))
    W = jax.random.uniform(kw, (fan_in, fan_out), jnp.float32, -bound, bound)
    b = jax.random.uniform(kb, (1, fan_out), jnp.float32, -bound, bound)
    return W, b


def _init_mlp(key, data_dim, n_hidden):
    # hidden_dims = 2 -> Linear(D,H), act, Linear(H,H), act, Linear(H,D)
    k1, k2, k3 = jax.random.split(key, 3)
    return (
        _init_linear(k1, data_dim, n_hidden),
        _init_linear(k2, n_hidden, n_hidden),
        _init_linear(k3, n_hidden, data_dim),
    )


# ---------------------------------------------------------------------------
# Pure-JAX reference (mirrors the PyTorch module exactly)
# ---------------------------------------------------------------------------
def _reference(x, mask, scale_params, translate_params):
    def mlp(p, act, h):
        (w1, b1), (w2, b2), (w3, b3) = p
        h = act(h @ w1 + b1)
        h = act(h @ w2 + b2)
        return h @ w3 + b3

    x_m = x * mask
    s = mlp(scale_params, jnp.tanh, x_m)
    t = mlp(translate_params, lambda z: jnp.maximum(z, 0.0), x_m)
    u = x_m + (1.0 - mask) * (x - t) * jnp.exp(-s)
    log_det = -jnp.sum((1.0 - mask) * s, axis=1)
    return u, log_det


# ---------------------------------------------------------------------------
if __name__ == "__main__":
    DATA_DIM = 4   # data_dim
    N_HIDDEN = 32  # n_hidden  (hidden_dims = 2 baked into init/kernel)
    B_SMALL = 8
    B_LARGE = 1037  # exercises batch padding + multi-step grid + resident weights

    key = jax.random.PRNGKey(0)
    kx, ks, kt, kx2 = jax.random.split(key, 4)

    mask = (jnp.arange(DATA_DIM) % 2 == 0).astype(jnp.float32)[None, :]
    scale_params = _init_mlp(ks, DATA_DIM, N_HIDDEN)
    translate_params = _init_mlp(kt, DATA_DIM, N_HIDDEN)

    ok = True
    for kk, B in ((kx, B_SMALL), (kx2, B_LARGE)):
        x = jax.random.normal(kk, (B, DATA_DIM), jnp.float32)
        u, log_det = coupling_forward(x, mask, scale_params, translate_params)
        u, log_det = jax.block_until_ready((u, log_det))
        u_ref, log_det_ref = _reference(x, mask, scale_params, translate_params)

        assert u.shape == (B, DATA_DIM) and log_det.shape == (B,)
        ok &= bool(jnp.allclose(u, u_ref, atol=1e-4, rtol=1e-4))
        ok &= bool(jnp.allclose(log_det, log_det_ref, atol=1e-4, rtol=1e-4))

    assert ok
    print("KERNEL_OK")
</pallas_src>

<mosaic_0001>
module attributes {stable_mosaic.version = 11 : i64} {
  func.func @_coupling_kernel(%arg0: i32, %arg1: memref<8x4xf32, #tpu.memory_space<vmem>>, %arg2: memref<3x64x64xf32, #tpu.memory_space<vmem>>, %arg3: memref<8x64xf32, #tpu.memory_space<vmem>>, %arg4: memref<8x4xf32, #tpu.memory_space<vmem>>, %arg5: memref<8x1xf32, #tpu.memory_space<vmem>>) attributes {dimension_semantics = [#tpu.dimension_semantics<parallel>], iteration_bounds = array<i64: 1>, scalar_prefetch = 0 : i64, scratch_operands = 0 : i64, tpu.core_type = #tpu.core_type<tc>, window_params = [{transform_indices = @transform_0, window_bounds = array<i64: 8, 4>}, {pipeline_mode = #tpu.pipeline_mode<synchronous>, transform_indices = @transform_1, window_bounds = array<i64: 3, 64, 64>}, {pipeline_mode = #tpu.pipeline_mode<synchronous>, transform_indices = @transform_2, window_bounds = array<i64: 8, 64>}, {transform_indices = @transform_3, window_bounds = array<i64: 8, 4>}, {transform_indices = @transform_4, window_bounds = array<i64: 8, 1>}]} {
    %c0 = arith.constant 0 : index
    %c0_0 = arith.constant 0 : index
    %0 = vector.load %arg1[%c0, %c0_0] : memref<8x4xf32, #tpu.memory_space<vmem>>, vector<8x4xf32>
    %c0_1 = arith.constant 0 : index
    %c0_2 = arith.constant 0 : index
    %1 = vector.load %arg3[%c0_1, %c0_2] : memref<8x64xf32, #tpu.memory_space<vmem>>, vector<8x64xf32>
    %2 = vector.extract_strided_slice %1 {offsets = [0, 0], sizes = [1, 64], strides = [1, 1]} : vector<8x64xf32> to vector<1x64xf32>
    %3 = vector.extract_strided_slice %1 {offsets = [1, 0], sizes = [1, 64], strides = [1, 1]} : vector<8x64xf32> to vector<1x64xf32>
    %4 = vector.extract_strided_slice %1 {offsets = [2, 0], sizes = [1, 64], strides = [1, 1]} : vector<8x64xf32> to vector<1x64xf32>
    %5 = vector.extract_strided_slice %1 {offsets = [3, 0], sizes = [1, 4], strides = [1, 1]} : vector<8x64xf32> to vector<1x4xf32>
    %6 = vector.extract_strided_slice %1 {offsets = [4, 0], sizes = [1, 4], strides = [1, 1]} : vector<8x64xf32> to vector<1x4xf32>
    %c0_3 = arith.constant 0 : index
    %c0_4 = arith.constant 0 : index
    %c0_5 = arith.constant 0 : index
    %7 = vector.load %arg2[%c0_3, %c0_4, %c0_5] : memref<3x64x64xf32, #tpu.memory_space<vmem>>, vector<1x64x64xf32>
    %8 = vector.shape_cast %7 : vector<1x64x64xf32> to vector<64x64xf32>
    %9 = vector.extract_strided_slice %8 {offsets = [0, 0], sizes = [4, 64], strides = [1, 1]} : vector<64x64xf32> to vector<4x64xf32>
    %c1 = arith.constant 1 : index
    %c0_6 = arith.constant 0 : index
    %c0_7 = arith.constant 0 : index
    %10 = vector.load %arg2[%c1, %c0_6, %c0_7] : memref<3x64x64xf32, #tpu.memory_space<vmem>>, vector<1x64x64xf32>
    %11 = vector.shape_cast %10 : vector<1x64x64xf32> to vector<64x64xf32>
    %c2 = arith.constant 2 : index
    %c0_8 = arith.constant 0 : index
    %c0_9 = arith.constant 0 : index
    %12 = vector.load %arg2[%c2, %c0_8, %c0_9] : memref<3x64x64xf32, #tpu.memory_space<vmem>>, vector<1x64x64xf32>
    %13 = vector.shape_cast %12 : vector<1x64x64xf32> to vector<64x64xf32>
    %cst = arith.constant dense<0.000000e+00> : vector<8x64xf32>
    %14 = tpu.matmul %0, %9, %cst {dimension_numbers = #tpu.dot_dimension_numbers<[1], [0], [0], [1], [0, 0, 1, 1], [], []>} : vector<8x4xf32>, vector<4x64xf32>, vector<8x64xf32> -> vector<8x64xf32>
    %15 = vector.broadcast %2 : vector<1x64xf32> to vector<8x64xf32>
    %16 = arith.addf %14, %15 : vector<8x64xf32>
    %17 = tpu.iota {dimensions = array<i32: 1>} : vector<8x64xi32>
    %c32_i32 = arith.constant 32 : i32
    %18 = vector.broadcast %c32_i32 : i32 to vector<8x64xi32>
    %19 = arith.cmpi slt, %17, %18 : vector<8x64xi32>
    %20 = math.tanh %16 : vector<8x64xf32>
    %cst_10 = arith.constant 0.000000e+00 : f32
    %21 = vector.broadcast %cst_10 : f32 to vector<8x64xf32>
    %22 = arith.maximumf %16, %21 : vector<8x64xf32>
    %23 = arith.select %19, %20, %22 : vector<8x64xi1>, vector<8x64xf32>
    %cst_11 = arith.constant dense<0.000000e+00> : vector<8x64xf32>
    %24 = tpu.matmul %23, %11, %cst_11 {dimension_numbers = #tpu.dot_dimension_numbers<[1], [0], [0], [1], [0, 0, 1, 1], [], []>} : vector<8x64xf32>, vector<64x64xf32>, vector<8x64xf32> -> vector<8x64xf32>
    %25 = vector.broadcast %3 : vector<1x64xf32> to vector<8x64xf32>
    %26 = arith.addf %24, %25 : vector<8x64xf32>
    %27 = math.tanh %26 : vector<8x64xf32>
    %cst_12 = arith.constant 0.000000e+00 : f32
    %28 = vector.broadcast %cst_12 : f32 to vector<8x64xf32>
    %29 = arith.maximumf %26, %28 : vector<8x64xf32>
    %30 = arith.select %19, %27, %29 : vector<8x64xi1>, vector<8x64xf32>
    %cst_13 = arith.constant dense<0.000000e+00> : vector<8x64xf32>
    %31 = tpu.matmul %30, %13, %cst_13 {dimension_numbers = #tpu.dot_dimension_numbers<[1], [0], [0], [1], [0, 0, 1, 1], [], []>} : vector<8x64xf32>, vector<64x64xf32>, vector<8x64xf32> -> vector<8x64xf32>
    %32 = vector.broadcast %4 : vector<1x64xf32> to vector<8x64xf32>
    %33 = arith.addf %31, %32 : vector<8x64xf32>
    %34 = vector.extract_strided_slice %33 {offsets = [0, 0], sizes = [8, 4], strides = [1, 1]} : vector<8x64xf32> to vector<8x4xf32>
    %35 = vector.extract_strided_slice %33 {offsets = [0, 4], sizes = [8, 4], strides = [1, 1]} : vector<8x64xf32> to vector<8x4xf32>
    %36 = vector.extract_strided_slice %33 {offsets = [0, 8], sizes = [8, 1], strides = [1, 1]} : vector<8x64xf32> to vector<8x1xf32>
    %37 = vector.broadcast %5 : vector<1x4xf32> to vector<8x4xf32>
    %38 = arith.mulf %0, %37 : vector<8x4xf32>
    %39 = arith.subf %0, %35 : vector<8x4xf32>
    %40 = vector.broadcast %6 : vector<1x4xf32> to vector<8x4xf32>
    %41 = arith.mulf %40, %39 : vector<8x4xf32>
    %cst_14 = arith.constant 0.000000e+00 : f32
    %42 = vector.broadcast %cst_14 : f32 to vector<8x4xf32>
    %43 = arith.subf %42, %34 : vector<8x4xf32>
    %44 = math.exp %43 : vector<8x4xf32>
    %45 = arith.mulf %41, %44 : vector<8x4xf32>
    %46 = arith.addf %38, %45 : vector<8x4xf32>
    %c0_15 = arith.constant 0 : index
    %c0_16 = arith.constant 0 : index
    %47 = vector.load %arg4[%c0_15, %c0_16] : memref<8x4xf32, #tpu.memory_space<vmem>>, vector<8x4xf32>
    tpu.vector_store %arg4[%c0_15, %c0_16], %46 {strides = array<i32>} : memref<8x4xf32, #tpu.memory_space<vmem>>, vector<8x4xf32>,
    %c0_17 = arith.constant 0 : index
    %c0_18 = arith.constant 0 : index
    %48 = vector.load %arg5[%c0_17, %c0_18] : memref<8x1xf32, #tpu.memory_space<vmem>>, vector<8x1xf32>
    tpu.vector_store %arg5[%c0_17, %c0_18], %36 {strides = array<i32>} : memref<8x1xf32, #tpu.memory_space<vmem>>, vector<8x1xf32>,
    return
  }
  func.func @transform_0(%arg0: i32) -> (i32, i32) {
    %c0_i32 = arith.constant 0 : i32
    %c0_i32_0 = arith.constant 0 : i32
    return %arg0, %c0_i32 : i32, i32
  }
  func.func @transform_1(%arg0: i32) -> (i32, i32, i32) {
    %c0_i32 = arith.constant 0 : i32
    %c0_i32_0 = arith.constant 0 : i32
    %c0_i32_1 = arith.constant 0 : i32
    %c0_i32_2 = arith.constant 0 : i32
    return %c0_i32, %c0_i32_0, %c0_i32_1 : i32, i32, i32
  }
  func.func @transform_2(%arg0: i32) -> (i32, i32) {
    %c0_i32 = arith.constant 0 : i32
    %c0_i32_0 = arith.constant 0 : i32
    %c0_i32_1 = arith.constant 0 : i32
    return %c0_i32, %c0_i32_0 : i32, i32
  }
  func.func @transform_3(%arg0: i32) -> (i32, i32) {
    %c0_i32 = arith.constant 0 : i32
    %c0_i32_0 = arith.constant 0 : i32
    return %arg0, %c0_i32 : i32, i32
  }
  func.func @transform_4(%arg0: i32) -> (i32, i32) {
    %c0_i32 = arith.constant 0 : i32
    %c0_i32_0 = arith.constant 0 : i32
    return %arg0, %c0_i32 : i32, i32
  }
}

</mosaic_0001>

<llo_original>
// kernel: coupling_forward.1
$region0: #{coupling_forward.1}
  #allocation0 [shape = 'u32[]', space=smem, size = 0x4, offset = 0x4, fixed_abs, tag = 'smem constant byte address 0x4 - core index']
  #allocation1 [shape = 'u32[144,128]{1,0:T(1,128)}', space=vmem, size = 0x12000, scoped, tag = 'internal scratch']
  %s0 = inlined_call_operand.vmem [shape: f32[8,4], index: 0, kind: input, shape index: {}]
  %s1 = inlined_call_operand.vmem [shape: f32[3,64,64], index: 1, kind: input, shape index: {}]
  %s2 = inlined_call_operand.vmem [shape: f32[8,64], index: 2, kind: input, shape index: {}]
  %s3 = inlined_call_operand.vmem [shape: f32[8,4], index: 3, kind: output, shape index: {0}]
  %s4 = inlined_call_operand.vmem [shape: f32[8,1], index: 4, kind: output, shape index: {1}]
  %5 = xla_tuple %s3, %s4
  %s6 = sld [smem:[#allocation0]]
  $region30: #{coupling_forward.1} parent=0
    _
  %s8 = ssub.s32 1, %s6
  %s9 = scalar_select 0, %s8, %s6
  // Predicated region
  $region2: #{coupling_forward.1} parent=0 // pred_check
    _
  $region3: #{coupling_forward.1} parent=0 // pred_check_branch
    %11 = sbr.rel (0) target = $region5
  $region4: #{coupling_forward.1} parent=0 // pred_region
    _
  $region5: #{coupling_forward.1} parent=0 // pred_fallthru
    _
  // Predicated region
  $region6: #{coupling_forward.1} parent=0 // pred_check
    _
  $region7: #{coupling_forward.1} parent=0 // pred_check_branch
    %13 = sbr.rel (0) target = $region9
  $region8: #{coupling_forward.1} parent=0 // pred_region
    _
  $region9: #{coupling_forward.1} parent=0 // pred_fallthru
    _
  // Predicated region
  $region10: #{coupling_forward.1} parent=0 // pred_check
    _
  $region11: #{coupling_forward.1} parent=0 // pred_check_branch
    %15 = sbr.rel (0) target = $region13
  $region12: #{coupling_forward.1} parent=0 // pred_region
    _
  $region13: #{coupling_forward.1} parent=0 // pred_fallthru
    _
  %v16 = vld [vmem:[%s0] sm:$0xff]
  %v17 = vld [vmem:[%s2] sm:$0xff]
  %v18 = vld [vmem:[%s1] sm:$0xff]
  %s19 = scalar_lea.vmem %s1, 64
  %v20 = vld [vmem:[%s19] sm:$0xff]
  %v21 = vld [vmem:[%s19 + $0x8] sm:$0xff]
  %v22 = vld [vmem:[%s19 + $0x10] sm:$0xff]
  %v23 = vld [vmem:[%s19 + $0x18] sm:$0xff]
  %v24 = vld [vmem:[%s19 + $0x20] sm:$0xff]
  %v25 = vld [vmem:[%s19 + $0x28] sm:$0xff]
  %v26 = vld [vmem:[%s19 + $0x30] sm:$0xff]
  %v27 = vld [vmem:[%s19 + $0x38] sm:$0xff]
  %s28 = scalar_lea.vmem %s1, 128
  %v29 = vld [vmem:[%s28] sm:$0xff]
  %v30 = vld [vmem:[%s28 + $0x8] sm:$0xff]
  %v31 = vld [vmem:[%s28 + $0x10] sm:$0xff]
  %v32 = vld [vmem:[%s28 + $0x18] sm:$0xff]
  %v33 = vld [vmem:[%s28 + $0x20] sm:$0xff]
  %v34 = vld [vmem:[%s28 + $0x28] sm:$0xff]
  %v35 = vld [vmem:[%s28 + $0x30] sm:$0xff]
  %v36 = vld [vmem:[%s28 + $0x38] sm:$0xff]
  %v37 = vlaneseq
  %v38 = vshrl.u32 %v37, 7
  %v39 = vsub.s32 0, %v38
  %v40 = vrot.slane %v17, %v39
  %vm41 = vcmask 31744
  %v43 = vsel %vm41, %v16, 0
  %vm45 = vcmask 1043456
  %v47 = vsel %vm45, %v18, 0
  %49 = vmatprep.subr.mxu0 0.0
  %50 = vmatpush1.msra.mxu0 0.0
  %51 = vmatprep.subr.mxu0 0.0
  %52 = vmatpush1.msra.mxu0 0.0
  %53 = vmatprep.subr.mxu0 0.0
  %54 = vmatpush1.msra.mxu0 0.0
  %55 = vmatprep.subr.mxu0 0.0
  %56 = vmatpush1.msra.mxu0 0.0
  %57 = vmatprep.subr.mxu0 0.0
  %58 = vmatpush1.msra.mxu0 0.0
  %59 = vmatprep.subr.mxu0 0.0
  %60 = vmatpush1.msra.mxu0 0.0
  %61 = vmatprep.subr.mxu0 0.0
  %62 = vmatpush1.msra.mxu0 0.0
  %63 = vmatprep.subr.mxu0 0.0
  %64 = vmatpush1.msra.mxu0 0.0
  %65 = vmatprep.subr.mxu0 0.0
  %66 = vmatpush1.msra.mxu0 0.0
  %67 = vmatprep.subr.mxu0 0.0
  %68 = vmatpush1.msra.mxu0 0.0
  %69 = vmatprep.subr.mxu0 0.0
  %70 = vmatpush1.msra.mxu0 0.0
  %71 = vmatprep.subr.mxu0 0.0
  %72 = vmatpush1.msra.mxu0 0.0
  %73 = vmatprep.subr.mxu0 0.0
  %74 = vmatpush1.msra.mxu0 0.0
  %75 = vmatprep.subr.mxu0 0.0
  %76 = vmatpush1.msra.mxu0 0.0
  %77 = vmatprep.subr.mxu0 0.0
  %78 = vmatpush1.msra.mxu0 0.0
  %79 = vmatprep.subr.mxu0 0.0
  %80 = vmatpush1.msra.mxu0 %v47
  %81 = vmatprep.subr.mxu0 0.0
  %82 = vmatpush2.msra.mxu0 0.0
  %83 = vmatprep.subr.mxu0 0.0
  %84 = vmatpush2.msra.mxu0 0.0
  %85 = vmatprep.subr.mxu0 0.0
  %86 = vmatpush2.msra.mxu0 0.0
  %87 = vmatprep.subr.mxu0 0.0
  %88 = vmatpush2.msra.mxu0 0.0
  %89 = vmatprep.subr.mxu0 0.0
  %90 = vmatpush2.msra.mxu0 0.0
  %91 = vmatprep.subr.mxu0 0.0
  %92 = vmatpush2.msra.mxu0 0.0
  %93 = vmatprep.subr.mxu0 0.0
  %94 = vmatpush2.msra.mxu0 0.0
  %95 = vmatprep.subr.mxu0 0.0
  %96 = vmatpush2.msra.mxu0 0.0
  %97 = vmatprep.subr.mxu0 0.0
  %98 = vmatpush2.msra.mxu0 0.0
  %99 = vmatprep.subr.mxu0 0.0
  %100 = vmatpush2.msra.mxu0 0.0
  %101 = vmatprep.subr.mxu0 0.0
  %102 = vmatpush2.msra.mxu0 0.0
  %103 = vmatprep.subr.mxu0 0.0
  %104 = vmatpush2.msra.mxu0 0.0
  %105 = vmatprep.subr.mxu0 0.0
  %106 = vmatpush2.msra.mxu0 0.0
  %107 = vmatprep.subr.mxu0 0.0
  %108 = vmatpush2.msra.mxu0 0.0
  %109 = vmatprep.subr.mxu0 0.0
  %110 = vmatpush2.msra.mxu0 0.0
  %111 = vmatprep.subr.mxu0 0.0
  %112 = vmatpush2.msra.mxu0 0.0
  %113 = vmatprep.mubr.f32.mxu0 0.0
  %114 = vmatmul.mubr.f32.gmra.mxu0 %v43
  %v115 = vpop.f32.mrf.mxu0
  %v116 = vadd.f32 %v40, %v115
  %v117 = vpop.f32.mrf.mxu0
  %118 = vdwg.mxu0
  %v119 = vlaneseq
  %v120 = vand.u32 %v119, 127
  %vm121 = vcmp.lt.s32.totalorder %v120, 32
  %v122 = vtanh.pop %v116
  %v123 = vmax.f32 %v116, 0.0
  %v124 = vsel %vm121, %v122, %v123
  %v125 = vlaneseq
  %v126 = vshrl.u32 %v125, 7
  %v127 = vsub.s32 1, %v126
  %v128 = vrot.slane %v17, %v127
  %vm129 = vcmask 523264
  %v131 = vsel %vm129, %v124, 0
  %133 = vmatprep.subr.mxu0 0.0
  %134 = vmatpush1.msra.mxu0 0.0
  %135 = vmatprep.subr.mxu0 0.0
  %136 = vmatpush1.msra.mxu0 0.0
  %137 = vmatprep.subr.mxu0 0.0
  %138 = vmatpush1.msra.mxu0 0.0
  %139 = vmatprep.subr.mxu0 0.0
  %140 = vmatpush1.msra.mxu0 0.0
  %141 = vmatprep.subr.mxu0 0.0
  %142 = vmatpush1.msra.mxu0 0.0
  %143 = vmatprep.subr.mxu0 0.0
  %144 = vmatpush1.msra.mxu0 0.0
  %145 = vmatprep.subr.mxu0 0.0
  %146 = vmatpush1.msra.mxu0 0.0
  %147 = vmatprep.subr.mxu0 0.0
  %148 = vmatpush1.msra.mxu0 0.0
  %149 = vmatprep.subr.mxu0 0.0
  %150 = vmatpush1.msra.mxu0 %v27
  %151 = vmatprep.subr.mxu0 0.0
  %152 = vmatpush1.msra.mxu0 %v26
  %153 = vmatprep.subr.mxu0 0.0
  %154 = vmatpush1.msra.mxu0 %v25
  %155 = vmatprep.subr.mxu0 0.0
  %156 = vmatpush1.msra.mxu0 %v24
  %157 = vmatprep.subr.mxu0 0.0
  %158 = vmatpush1.msra.mxu0 %v23
  %159 = vmatprep.subr.mxu0 0.0
  %160 = vmatpush1.msra.mxu0 %v22
  %161 = vmatprep.subr.mxu0 0.0
  %162 = vmatpush1.msra.mxu0 %v21
  %163 = vmatprep.subr.mxu0 0.0
  %164 = vmatpush1.msra.mxu0 %v20
  %165 = vmatprep.subr.mxu0 0.0
  %166 = vmatpush2.msra.mxu0 0.0
  %167 = vmatprep.subr.mxu0 0.0
  %168 = vmatpush2.msra.mxu0 0.0
  %169 = vmatprep.subr.mxu0 0.0
  %170 = vmatpush2.msra.mxu0 0.0
  %171 = vmatprep.subr.mxu0 0.0
  %172 = vmatpush2.msra.mxu0 0.0
  %173 = vmatprep.subr.mxu0 0.0
  %174 = vmatpush2.msra.mxu0 0.0
  %175 = vmatprep.subr.mxu0 0.0
  %176 = vmatpush2.msra.mxu0 0.0
  %177 = vmatprep.subr.mxu0 0.0
  %178 = vmatpush2.msra.mxu0 0.0
  %179 = vmatprep.subr.mxu0 0.0
  %180 = vmatpush2.msra.mxu0 0.0
  %181 = vmatprep.subr.mxu0 0.0
  %182 = vmatpush2.msra.mxu0 0.0
  %183 = vmatprep.subr.mxu0 0.0
  %184 = vmatpush2.msra.mxu0 0.0
  %185 = vmatprep.subr.mxu0 0.0
  %186 = vmatpush2.msra.mxu0 0.0
  %187 = vmatprep.subr.mxu0 0.0
  %188 = vmatpush2.msra.mxu0 0.0
  %189 = vmatprep.subr.mxu0 0.0
  %190 = vmatpush2.msra.mxu0 0.0
  %191 = vmatprep.subr.mxu0 0.0
  %192 = vmatpush2.msra.mxu0 0.0
  %193 = vmatprep.subr.mxu0 0.0
  %194 = vmatpush2.msra.mxu0 0.0
  %195 = vmatprep.subr.mxu0 0.0
  %196 = vmatpush2.msra.mxu0 0.0
  %197 = vmatprep.mubr.f32.mxu0 0.0
  %198 = vmatmul.mubr.f32.gmra.mxu0 %v131
  %v199 = vpop.f32.mrf.mxu0
  %v200 = vadd.f32 %v128, %v199
  %v201 = vpop.f32.mrf.mxu0
  %202 = vdwg.mxu0
  %v203 = vtanh.pop %v200
  %v204 = vmax.f32 %v200, 0.0
  %v205 = vsel %vm121, %v203, %v204
  %v206 = vlaneseq
  %v207 = vshrl.u32 %v206, 7
  %v208 = vsub.s32 2, %v207
  %v209 = vrot.slane %v17, %v208
  %v211 = vsel %vm129, %v205, 0
  %213 = vmatprep.subr.mxu0 0.0
  %214 = vmatpush1.msra.mxu0 0.0
  %215 = vmatprep.subr.mxu0 0.0
  %216 = vmatpush1.msra.mxu0 0.0
  %217 = vmatprep.subr.mxu0 0.0
  %218 = vmatpush1.msra.mxu0 0.0
  %219 = vmatprep.subr.mxu0 0.0
  %220 = vmatpush1.msra.mxu0 0.0
  %221 = vmatprep.subr.mxu0 0.0
  %222 = vmatpush1.msra.mxu0 0.0
  %223 = vmatprep.subr.mxu0 0.0
  %224 = vmatpush1.msra.mxu0 0.0
  %225 = vmatprep.subr.mxu0 0.0
  %226 = vmatpush1.msra.mxu0 0.0
  %227 = vmatprep.subr.mxu0 0.0
  %228 = vmatpush1.msra.mxu0 0.0
  %229 = vmatprep.subr.mxu0 0.0
  %230 = vmatpush1.msra.mxu0 %v36
  %231 = vmatprep.subr.mxu0 0.0
  %232 = vmatpush1.msra.mxu0 %v35
  %233 = vmatprep.subr.mxu0 0.0
  %234 = vmatpush1.msra.mxu0 %v34
  %235 = vmatprep.subr.mxu0 0.0
  %236 = vmatpush1.msra.mxu0 %v33
  %237 = vmatprep.subr.mxu0 0.0
  %238 = vmatpush1.msra.mxu0 %v32
  %239 = vmatprep.subr.mxu0 0.0
  %240 = vmatpush1.msra.mxu0 %v31
  %241 = vmatprep.subr.mxu0 0.0
  %242 = vmatpush1.msra.mxu0 %v30
  %243 = vmatprep.subr.mxu0 0.0
  %244 = vmatpush1.msra.mxu0 %v29
  %245 = vmatprep.subr.mxu0 0.0
  %246 = vmatpush2.msra.mxu0 0.0
  %247 = vmatprep.subr.mxu0 0.0
  %248 = vmatpush2.msra.mxu0 0.0
  %249 = vmatprep.subr.mxu0 0.0
  %250 = vmatpush2.msra.mxu0 0.0
  %251 = vmatprep.subr.mxu0 0.0
  %252 = vmatpush2.msra.mxu0 0.0
  %253 = vmatprep.subr.mxu0 0.0
  %254 = vmatpush2.msra.mxu0 0.0
  %255 = vmatprep.subr.mxu0 0.0
  %256 = vmatpush2.msra.mxu0 0.0
  %257 = vmatprep.subr.mxu0 0.0
  %258 = vmatpush2.msra.mxu0 0.0
  %259 = vmatprep.subr.mxu0 0.0
  %260 = vmatpush2.msra.mxu0 0.0
  %261 = vmatprep.subr.mxu0 0.0
  %262 = vmatpush2.msra.mxu0 0.0
  %263 = vmatprep.subr.mxu0 0.0
  %264 = vmatpush2.msra.mxu0 0.0
  %265 = vmatprep.subr.mxu0 0.0
  %266 = vmatpush2.msra.mxu0 0.0
  %267 = vmatprep.subr.mxu0 0.0
  %268 = vmatpush2.msra.mxu0 0.0
  %269 = vmatprep.subr.mxu0 0.0
  %270 = vmatpush2.msra.mxu0 0.0
  %271 = vmatprep.subr.mxu0 0.0
  %272 = vmatpush2.msra.mxu0 0.0
  %273 = vmatprep.subr.mxu0 0.0
  %274 = vmatpush2.msra.mxu0 0.0
  %275 = vmatprep.subr.mxu0 0.0
  %276 = vmatpush2.msra.mxu0 0.0
  %277 = vmatprep.mubr.f32.mxu0 0.0
  %278 = vmatmul.mubr.f32.gmra.mxu0 %v211
  %v279 = vpop.f32.mrf.mxu0
  %v280 = vadd.f32 %v209, %v279
  %v281 = vpop.f32.mrf.mxu0
  %282 = vdwg.mxu0
  %v283 = vlaneseq
  %v284 = vshrl.u32 %v283, 7
  %v285 = vsub.s32 3, %v284
  %v286 = vrot.slane %v17, %v285
  %v287 = vmul.f32 %v16, %v286
  %289 = vrot.lane.b32.xlu0 %v280, 124
  %v290 = vpop.permute.xlu0 %289
  %v292 = vsub.f32 %v16, %v290
  %v293 = vlaneseq
  %v294 = vshrl.u32 %v293, 7
  %v295 = vsub.s32 4, %v294
  %v296 = vrot.slane %v17, %v295
  %v297 = vmul.f32 %v296, %v292
  %v298 = vsub.f32 0.0, %v280
  %v299 = vmul.f32 %v298, 1.442695
  %v300 = vpow.pop %v299
  %v301 = vmul.f32 %v297, %v300
  %v302 = vadd.f32 %v287, %v301
  %303 = vst.msk [vmem:[%s3] sm:$0xff] %vm41, %v302
  %304 = vrot.lane.b32.xlu0 %v280, 120
  %v305 = vpop.permute.xlu0 %304
  %vm307 = vcmask 7168
  %308 = vst.msk [vmem:[%s4] sm:$0xff] %vm307, %v305
  // Predicated region
  $region14: #{coupling_forward.1} parent=0 // pred_check
    _
  $region15: #{coupling_forward.1} parent=0 // pred_check_branch
    %310 = sbr.rel (0) target = $region17
  $region16: #{coupling_forward.1} parent=0 // pred_region
    _
  $region17: #{coupling_forward.1} parent=0 // pred_fallthru
    _
  // Predicated region
  $region18: #{coupling_forward.1} parent=0 // pred_check
    _
  $region19: #{coupling_forward.1} parent=0 // pred_check_branch
    %312 = sbr.rel (0) target = $region21
  $region20: #{coupling_forward.1} parent=0 // pred_region
    _
  $region21: #{coupling_forward.1} parent=0 // pred_fallthru
    _
  // Predicated region
  $region22: #{coupling_forward.1} parent=0 // pred_check
    _
  $region23: #{coupling_forward.1} parent=0 // pred_check_branch
    %314 = sbr.rel (0) target = $region25
  $region24: #{coupling_forward.1} parent=0 // pred_region
    _
  $region25: #{coupling_forward.1} parent=0 // pred_fallthru
    _
  // Predicated region
  $region26: #{coupling_forward.1} parent=0 // pred_check
    _
  $region27: #{coupling_forward.1} parent=0 // pred_check_branch
    %316 = sbr.rel (0) target = $region29
  $region28: #{coupling_forward.1} parent=0 // pred_region
    _
  $region29: #{coupling_forward.1} parent=0 // pred_fallthru
    _

</llo_original>
